<compile_context>
chip_gen: v6e
topology: v6e:2x2x1
jax: 0.10.0
libtpu: 0.0.40
codegen_flags: <defaults>
</compile_context>

<pallas_src>
import jax
import jax.numpy as jnp
from jax.experimental import pallas as pl
from jax.experimental.pallas import tpu as pltpu


def _round_up(x: int, m: int) -> int:
    return ((x + m - 1) // m) * m


def _inner_product_decoder_kernel(a_ref, bt_ref, o_ref):
    # a_ref : (tm, D)  row tile i of the embedding
    # bt_ref: (D, tn)  column tile j of the pre-transposed embedding
    # o_ref : (tm, tn) output tile of sigmoid(Z @ Z.T)
    #
    # RHS already has the contraction dim leading, so the MXU is fed directly
    # (no in-kernel vxpose) and the output store is lane-dense (tn % 128 == 0).
    scores = jnp.dot(a_ref[...], bt_ref[...], preferred_element_type=jnp.float32)
    o_ref[...] = jax.nn.sigmoid(scores).astype(o_ref.dtype)


def inner_product_decoder(
    embedding: jax.Array,
    *,
    tile: int = 512,
    matmul_dtype=jnp.bfloat16,   # set to None to keep full f32 operands
    out_dtype=None,              # default: mirror the embedding dtype (module semantics)
):
    """hat_adj = sigmoid(embedding @ embedding.T) via a tiled Pallas TPU kernel."""
    N, D = embedding.shape
    out_dtype = jnp.dtype(out_dtype or embedding.dtype)

    # Lane-dense square tiles: multiple of 128, as large as `tile` allows.
    t = _round_up(min(int(tile), _round_up(N, 128)), 128)
    n_pad = _round_up(N, t)

    emb = embedding if matmul_dtype is None else embedding.astype(matmul_dtype)
    if n_pad != N:
        # Zero-pad rows so input tiles divide exactly (deterministic reads);
        # the padded rows/cols only land in output regions Pallas discards.
        emb = jnp.pad(emb, ((0, n_pad - N), (0, 0)))
    # One-time XLA transpose of the (N, D) operand — negligible vs. N/t
    # per-step in-kernel transposes of a (tn, D) RHS tile.
    emb_t = emb.T  # (D, n_pad)

    grid = (pl.cdiv(N, t), pl.cdiv(N, t))

    # Double-buffered working set: 2 * (A tile + B tile + out tile).
    in_bytes = emb.dtype.itemsize
    vmem_bytes = 2 * ((t * D + D * t) * in_bytes + t * t * out_dtype.itemsize)
    # Give headroom, but stay within every generation's VMEM (v7x: 64 MiB phys).
    vmem_limit = min(max(2 * vmem_bytes, 32 * 1024 * 1024), 64 * 1024 * 1024)

    return pl.pallas_call(
        _inner_product_decoder_kernel,
        out_shape=jax.ShapeDtypeStruct((N, N), out_dtype),
        grid_spec=pltpu.PrefetchScalarGridSpec(
            num_scalar_prefetch=0,
            grid=grid,
            in_specs=[
                # Row tile i; block index constant across the inner j axis,
                # so Pallas does not re-DMA it per step.
                pl.BlockSpec((t, D), lambda i, j: (i, 0)),
                # Column tile j of the pre-transposed embedding.
                pl.BlockSpec((D, t), lambda i, j: (0, j)),
            ],
            # Natural (N, N) output; edge blocks are partial and Pallas drops
            # the out-of-range part of the writeback (no post-kernel slice).
            out_specs=pl.BlockSpec((t, t), lambda i, j: (i, j)),
        ),
        compiler_params=pltpu.CompilerParams(
            dimension_semantics=("parallel", "parallel"),
            vmem_limit_bytes=vmem_limit,
        ),
    )(emb, emb_t)


if __name__ == "__main__":
    # Module has no parameters (reset_parameters is a no-op).
    key = jax.random.PRNGKey(0)

    # Small synthetic node-embedding matrix.
    N, D = 256, 64
    embedding = jax.random.normal(key, (N, D), dtype=jnp.float32)

    hat_adj = jax.block_until_ready(inner_product_decoder(embedding))
    ref = jax.nn.sigmoid(embedding @ embedding.T)
    assert hat_adj.shape == (N, N)
    assert hat_adj.dtype == embedding.dtype
    # bf16 operands -> loosened tolerance (precision loss only in the logits).
    assert jnp.allclose(hat_adj, ref, atol=3e-2, rtol=3e-2)

    # Ragged N + multi-tile grid path (exercises partial edge blocks, 2-D grid).
    key2 = jax.random.fold_in(key, 1)
    N2 = 300
    embedding2 = jax.random.normal(key2, (N2, D), dtype=jnp.float32)
    hat_adj2 = jax.block_until_ready(inner_product_decoder(embedding2, tile=128))
    ref2 = jax.nn.sigmoid(embedding2 @ embedding2.T)
    assert hat_adj2.shape == (N2, N2)
    assert jnp.allclose(hat_adj2, ref2, atol=3e-2, rtol=3e-2)

    # Ragged N with the default tile (single partial block covering the array).
    hat_adj2b = jax.block_until_ready(inner_product_decoder(embedding2))
    assert hat_adj2b.shape == (N2, N2)
    assert jnp.allclose(hat_adj2b, ref2, atol=3e-2, rtol=3e-2)

    # Full-f32 operand path matches the reference tightly.
    hat_adj3 = jax.block_until_ready(inner_product_decoder(embedding, matmul_dtype=None))
    assert jnp.allclose(hat_adj3, ref, atol=1e-5, rtol=1e-5)

    print("KERNEL_OK")
</pallas_src>

<mosaic_0001>
module attributes {stable_mosaic.version = 11 : i64} {
  func.func @_inner_product_decoder_kernel(%arg0: i32, %arg1: i32, %arg2: memref<256x64xbf16, #tpu.memory_space<vmem>>, %arg3: memref<64x256xbf16, #tpu.memory_space<vmem>>, %arg4: memref<256x256xf32, #tpu.memory_space<vmem>>) attributes {dimension_semantics = [#tpu.dimension_semantics<parallel>, #tpu.dimension_semantics<parallel>], iteration_bounds = array<i64: 1, 1>, scalar_prefetch = 0 : i64, scratch_operands = 0 : i64, tpu.core_type = #tpu.core_type<tc>, window_params = [{transform_indices = @transform_0, window_bounds = array<i64: 256, 64>}, {transform_indices = @transform_1, window_bounds = array<i64: 64, 256>}, {transform_indices = @transform_2, window_bounds = array<i64: 256, 256>}]} {
    %c0 = arith.constant 0 : index
    %c0_0 = arith.constant 0 : index
    %0 = vector.load %arg2[%c0, %c0_0] : memref<256x64xbf16, #tpu.memory_space<vmem>>, vector<256x64xbf16>
    %c0_1 = arith.constant 0 : index
    %c0_2 = arith.constant 0 : index
    %1 = vector.load %arg3[%c0_1, %c0_2] : memref<64x256xbf16, #tpu.memory_space<vmem>>, vector<64x256xbf16>
    %cst = arith.constant dense<0.000000e+00> : vector<256x256xf32>
    %2 = tpu.matmul %0, %1, %cst {dimension_numbers = #tpu.dot_dimension_numbers<[1], [0], [0], [1], [0, 0, 1, 1], [], []>} : vector<256x64xbf16>, vector<64x256xbf16>, vector<256x256xf32> -> vector<256x256xf32>
    %3 = arith.negf %2 : vector<256x256xf32>
    %4 = math.exp %3 : vector<256x256xf32>
    %cst_3 = arith.constant 1.000000e+00 : f32
    %5 = vector.broadcast %cst_3 : f32 to vector<256x256xf32>
    %6 = arith.addf %5, %4 : vector<256x256xf32>
    %7 = arith.divf %5, %6 : vector<256x256xf32>
    %c0_4 = arith.constant 0 : index
    %c0_5 = arith.constant 0 : index
    %8 = vector.load %arg4[%c0_4, %c0_5] : memref<256x256xf32, #tpu.memory_space<vmem>>, vector<256x256xf32>
    tpu.vector_store %arg4[%c0_4, %c0_5], %7 {strides = array<i32>} : memref<256x256xf32, #tpu.memory_space<vmem>>, vector<256x256xf32>,
    return
  }
  func.func @transform_0(%arg0: i32, %arg1: i32) -> (i32, i32) {
    %c0_i32 = arith.constant 0 : i32
    %c0_i32_0 = arith.constant 0 : i32
    return %arg0, %c0_i32 : i32, i32
  }
  func.func @transform_1(%arg0: i32, %arg1: i32) -> (i32, i32) {
    %c0_i32 = arith.constant 0 : i32
    %c0_i32_0 = arith.constant 0 : i32
    return %c0_i32, %arg1 : i32, i32
  }
  func.func @transform_2(%arg0: i32, %arg1: i32) -> (i32, i32) {
    %c0_i32 = arith.constant 0 : i32
    return %arg0, %arg1 : i32, i32
  }
}

</mosaic_0001>

<llo_original>
// kernel: tpu_custom_call.1
$region0: #{tpu_custom_call.1}
  #allocation0 [shape = 'u32[]', space=smem, size = 0x4, offset = 0x4, fixed_abs, tag = 'smem constant byte address 0x4 - core index']
  #allocation1 [shape = 'u32[144,128]{1,0:T(1,128)}', space=vmem, size = 0x12000, scoped, tag = 'internal scratch']
  %s0 = inlined_call_operand.vmem [shape: bf16[256,64], index: 0, kind: input, shape index: {}]
  %s1 = inlined_call_operand.vmem [shape: bf16[64,256], index: 1, kind: input, shape index: {}]
  %s2 = inlined_call_operand.hbm [shape: f32[256,256], index: 2, kind: output, shape index: {}]
  %s3 = sld [smem:[#allocation0]]
  $region18: #{tpu_custom_call.1} parent=0
    _
  %s5 = ssub.s32 1, %s3
  %s6 = scalar_select 0, %s5, %s3
  $region1: #{tpu_custom_call.1} parent=0
    #allocation2 [shape = 'u8[262144]{0}', space=vmem, size = 0x40000, scoped, tag = 'output window, operand 0, single buffered']
    #allocation3 [shape = 's32[1]{0}', space=sflag, size = 0x4, scoped, tag = 'scoped memory for tpu_custom_call.1']
    %7 = vsyncpa [#allocation3], 0
    // Predicated region
    $region2: #{tpu_custom_call.1} parent=1 // pred_check
      _
    $region3: #{tpu_custom_call.1} parent=1 // pred_check_branch
      %9 = sbr.rel (0) target = $region5
    $region4: #{tpu_custom_call.1} parent=1 // pred_region
      _
    $region5: #{tpu_custom_call.1} parent=1 // pred_fallthru
      _
    // Predicated region
    $region6: #{tpu_custom_call.1} parent=1 // pred_check
      _
    $region7: #{tpu_custom_call.1} parent=1 // pred_check_branch
      %11 = sbr.rel (0) target = $region9
    $region8: #{tpu_custom_call.1} parent=1 // pred_region
      _
    $region9: #{tpu_custom_call.1} parent=1 // pred_fallthru
      _
    %v13 = vld [vmem:[%s0] sm:$0xf]
    %v14 = vld [vmem:[%s0 + $0x4] sm:$0xf]
    %v15 = vld [vmem:[%s0 + $0x8] sm:$0xf]
    %v16 = vld [vmem:[%s0 + $0xc] sm:$0xf]
    %v17 = vld [vmem:[%s0 + $0x10] sm:$0xf]
    %v18 = vld [vmem:[%s0 + $0x14] sm:$0xf]
    %v19 = vld [vmem:[%s0 + $0x18] sm:$0xf]
    %v20 = vld [vmem:[%s0 + $0x1c] sm:$0xf]
    %v21 = vld [vmem:[%s0 + $0x20] sm:$0xf]
    %v22 = vld [vmem:[%s0 + $0x24] sm:$0xf]
    %v23 = vld [vmem:[%s0 + $0x28] sm:$0xf]
    %v24 = vld [vmem:[%s0 + $0x2c] sm:$0xf]
    %v25 = vld [vmem:[%s0 + $0x30] sm:$0xf]
    %v26 = vld [vmem:[%s0 + $0x34] sm:$0xf]
    %v27 = vld [vmem:[%s0 + $0x38] sm:$0xf]
    %v28 = vld [vmem:[%s0 + $0x3c] sm:$0xf]
    %v29 = vld [vmem:[%s0 + $0x40] sm:$0xf]
    %v30 = vld [vmem:[%s0 + $0x44] sm:$0xf]
    %v31 = vld [vmem:[%s0 + $0x48] sm:$0xf]
    %v32 = vld [vmem:[%s0 + $0x4c] sm:$0xf]
    %v33 = vld [vmem:[%s0 + $0x50] sm:$0xf]
    %v34 = vld [vmem:[%s0 + $0x54] sm:$0xf]
    %v35 = vld [vmem:[%s0 + $0x58] sm:$0xf]
    %v36 = vld [vmem:[%s0 + $0x5c] sm:$0xf]
    %v37 = vld [vmem:[%s0 + $0x60] sm:$0xf]
    %v38 = vld [vmem:[%s0 + $0x64] sm:$0xf]
    %v39 = vld [vmem:[%s0 + $0x68] sm:$0xf]
    %v40 = vld [vmem:[%s0 + $0x6c] sm:$0xf]
    %v41 = vld [vmem:[%s0 + $0x70] sm:$0xf]
    %v42 = vld [vmem:[%s0 + $0x74] sm:$0xf]
    %v43 = vld [vmem:[%s0 + $0x78] sm:$0xf]
    %v44 = vld [vmem:[%s0 + $0x7c] sm:$0xf]
    %v45 = vld [vmem:[%s1] sm:$0xff]
    %v46 = vld [vmem:[%s1 + $0x8] sm:$0xff]
    %v47 = vld [vmem:[%s1 + $0x10] sm:$0xff]
    %v48 = vld [vmem:[%s1 + $0x18] sm:$0xff]
    %v49 = vld [vmem:[%s1 + $0x20] sm:$0xff]
    %v50 = vld [vmem:[%s1 + $0x28] sm:$0xff]
    %v51 = vld [vmem:[%s1 + $0x30] sm:$0xff]
    %v52 = vld [vmem:[%s1 + $0x38] sm:$0xff]
    %v85 = vunpack.c.l.b16 %v13
    %v86 = vunpack.c.l.b16 %v14
    %v87 = vunpack.c.l.b16 %v15
    %v88 = vunpack.c.l.b16 %v16
    %v89 = vunpack.c.l.b16 %v17
    %v90 = vunpack.c.l.b16 %v18
    %v91 = vunpack.c.l.b16 %v19
    %v92 = vunpack.c.l.b16 %v20
    %v93 = vunpack.c.l.b16 %v21
    %v94 = vunpack.c.l.b16 %v22
    %v95 = vunpack.c.l.b16 %v23
    %v96 = vunpack.c.l.b16 %v24
    %v97 = vunpack.c.l.b16 %v25
    %v98 = vunpack.c.l.b16 %v26
    %v99 = vunpack.c.l.b16 %v27
    %v100 = vunpack.c.l.b16 %v28
    %v101 = vunpack.c.l.b16 %v29
    %v102 = vunpack.c.l.b16 %v30
    %v103 = vunpack.c.l.b16 %v31
    %v104 = vunpack.c.l.b16 %v32
    %v105 = vunpack.c.l.b16 %v33
    %v106 = vunpack.c.l.b16 %v34
    %v107 = vunpack.c.l.b16 %v35
    %v108 = vunpack.c.l.b16 %v36
    %v109 = vunpack.c.l.b16 %v37
    %v110 = vunpack.c.l.b16 %v38
    %v111 = vunpack.c.l.b16 %v39
    %v112 = vunpack.c.l.b16 %v40
    %v113 = vunpack.c.l.b16 %v41
    %v114 = vunpack.c.l.b16 %v42
    %v115 = vunpack.c.l.b16 %v43
    %v116 = vunpack.c.l.b16 %v44
    %v117 = vpack.c.b16 %v86, %v85
    %v118 = vpack.c.b16 %v88, %v87
    %v119 = vpack.c.b16 %v90, %v89
    %v120 = vpack.c.b16 %v92, %v91
    %v121 = vpack.c.b16 %v94, %v93
    %v122 = vpack.c.b16 %v96, %v95
    %v123 = vpack.c.b16 %v98, %v97
    %v124 = vpack.c.b16 %v100, %v99
    %v125 = vpack.c.b16 %v102, %v101
    %v126 = vpack.c.b16 %v104, %v103
    %v127 = vpack.c.b16 %v106, %v105
    %v128 = vpack.c.b16 %v108, %v107
    %v129 = vpack.c.b16 %v110, %v109
    %v130 = vpack.c.b16 %v112, %v111
    %v131 = vpack.c.b16 %v114, %v113
    %v132 = vpack.c.b16 %v116, %v115
    %v141 = vunpack.c.l.b16 %v45
    %v142 = vunpack.c.h.b16 %v45
    %v143 = vunpack.c.l.b16 %v46
    %v144 = vunpack.c.h.b16 %v46
    %v145 = vunpack.c.l.b16 %v47
    %v146 = vunpack.c.h.b16 %v47
    %v147 = vunpack.c.l.b16 %v48
    %v148 = vunpack.c.h.b16 %v48
    %v149 = vunpack.c.l.b16 %v49
    %v150 = vunpack.c.h.b16 %v49
    %v151 = vunpack.c.l.b16 %v50
    %v152 = vunpack.c.h.b16 %v50
    %v153 = vunpack.c.l.b16 %v51
    %v154 = vunpack.c.h.b16 %v51
    %v155 = vunpack.c.l.b16 %v52
    %v156 = vunpack.c.h.b16 %v52
    %v157 = vpack.c.b16 %v143, %v141
    %v158 = vpack.c.b16 %v144, %v142
    %v159 = vpack.c.b16 %v147, %v145
    %v160 = vpack.c.b16 %v148, %v146
    %v161 = vpack.c.b16 %v151, %v149
    %v162 = vpack.c.b16 %v152, %v150
    %v163 = vpack.c.b16 %v155, %v153
    %v164 = vpack.c.b16 %v156, %v154
    %vm173 = vcmask 523264
    %v175 = vsel %vm173, %v117, 0
    %v178 = vsel %vm173, %v118, 0
    %v181 = vsel %vm173, %v119, 0
    %v184 = vsel %vm173, %v120, 0
    %v187 = vsel %vm173, %v121, 0
    %v190 = vsel %vm173, %v122, 0
    %v193 = vsel %vm173, %v123, 0
    %v196 = vsel %vm173, %v124, 0
    %v199 = vsel %vm173, %v125, 0
    %v202 = vsel %vm173, %v126, 0
    %v205 = vsel %vm173, %v127, 0
    %v208 = vsel %vm173, %v128, 0
    %v211 = vsel %vm173, %v129, 0
    %v214 = vsel %vm173, %v130, 0
    %v217 = vsel %vm173, %v131, 0
    %v220 = vsel %vm173, %v132, 0
    %222 = vmatprep.subr.bf16.mxu0 0
    %223 = vmatpush1.bf16.msra.mxu0 0
    %224 = vmatprep.subr.bf16.mxu0 0
    %225 = vmatpush1.bf16.msra.mxu0 0
    %226 = vmatprep.subr.bf16.mxu0 0
    %227 = vmatpush1.bf16.msra.mxu0 0
    %228 = vmatprep.subr.bf16.mxu0 0
    %229 = vmatpush1.bf16.msra.mxu0 0
    %230 = vmatprep.subr.bf16.mxu0 %v164
    %231 = vmatpush1.bf16.msra.mxu0 %v163
    %232 = vmatprep.subr.bf16.mxu0 %v162
    %233 = vmatpush1.bf16.msra.mxu0 %v161
    %234 = vmatprep.subr.bf16.mxu0 %v160
    %235 = vmatpush1.bf16.msra.mxu0 %v159
    %236 = vmatprep.subr.bf16.mxu0 %v158
    %237 = vmatpush1.bf16.msra.mxu0 %v157
    %238 = vmatprep.subr.bf16.mxu0 0
    %239 = vmatpush2.bf16.msra.mxu0 0
    %240 = vmatprep.subr.bf16.mxu0 0
    %241 = vmatpush2.bf16.msra.mxu0 0
    %242 = vmatprep.subr.bf16.mxu0 0
    %243 = vmatpush2.bf16.msra.mxu0 0
    %244 = vmatprep.subr.bf16.mxu0 0
    %245 = vmatpush2.bf16.msra.mxu0 0
    %246 = vmatprep.subr.bf16.mxu0 0
    %247 = vmatpush2.bf16.msra.mxu0 0
    %248 = vmatprep.subr.bf16.mxu0 0
    %249 = vmatpush2.bf16.msra.mxu0 0
    %250 = vmatprep.subr.bf16.mxu0 0
    %251 = vmatpush2.bf16.msra.mxu0 0
    %252 = vmatprep.subr.bf16.mxu0 0
    %253 = vmatpush2.bf16.msra.mxu0 0
    %254 = vmatprep.mubr.bf16.mxu0 0
    %255 = vmatmul.mubr.bf16.gmra.mxu0 %v175
    %v256 = vpop.f32.mrf.mxu0
    %v257 = vadd.f32 0.0, %v256
    %v258 = vpop.f32.mrf.mxu0
    %v259 = vadd.f32 0.0, %v258
    %v260 = vpop.f32.mrf.mxu0
    %v261 = vadd.f32 0.0, %v260
    %v262 = vpop.f32.mrf.mxu0
    %v263 = vadd.f32 0.0, %v262
    %264 = vmatprep.mubr.bf16.mxu0 0
    %265 = vmatmul.mubr.bf16.gmra.mxu0 %v178
    %v266 = vpop.f32.mrf.mxu0
    %v267 = vadd.f32 0.0, %v266
    %v268 = vpop.f32.mrf.mxu0
    %v269 = vadd.f32 0.0, %v268
    %v270 = vpop.f32.mrf.mxu0
    %v271 = vadd.f32 0.0, %v270
    %v272 = vpop.f32.mrf.mxu0
    %v273 = vadd.f32 0.0, %v272
    %274 = vmatprep.mubr.bf16.mxu0 0
    %275 = vmatmul.mubr.bf16.gmra.mxu0 %v181
    %v276 = vpop.f32.mrf.mxu0
    %v277 = vadd.f32 0.0, %v276
    %v278 = vpop.f32.mrf.mxu0
    %v279 = vadd.f32 0.0, %v278
    %v280 = vpop.f32.mrf.mxu0
    %v281 = vadd.f32 0.0, %v280
    %v282 = vpop.f32.mrf.mxu0
    %v283 = vadd.f32 0.0, %v282
    %284 = vmatprep.mubr.bf16.mxu0 0
    %285 = vmatmul.mubr.bf16.gmra.mxu0 %v184
    %v286 = vpop.f32.mrf.mxu0
    %v287 = vadd.f32 0.0, %v286
    %v288 = vpop.f32.mrf.mxu0
    %v289 = vadd.f32 0.0, %v288
    %v290 = vpop.f32.mrf.mxu0
    %v291 = vadd.f32 0.0, %v290
    %v292 = vpop.f32.mrf.mxu0
    %v293 = vadd.f32 0.0, %v292
    %294 = vmatprep.mubr.bf16.mxu0 0
    %295 = vmatmul.mubr.bf16.gmra.mxu0 %v187
    %v296 = vpop.f32.mrf.mxu0
    %v297 = vadd.f32 0.0, %v296
    %v298 = vpop.f32.mrf.mxu0
    %v299 = vadd.f32 0.0, %v298
    %v300 = vpop.f32.mrf.mxu0
    %v301 = vadd.f32 0.0, %v300
    %v302 = vpop.f32.mrf.mxu0
    %v303 = vadd.f32 0.0, %v302
    %304 = vmatprep.mubr.bf16.mxu0 0
    %305 = vmatmul.mubr.bf16.gmra.mxu0 %v190
    %v306 = vpop.f32.mrf.mxu0
    %v307 = vadd.f32 0.0, %v306
    %v308 = vpop.f32.mrf.mxu0
    %v309 = vadd.f32 0.0, %v308
    %v310 = vpop.f32.mrf.mxu0
    %v311 = vadd.f32 0.0, %v310
    %v312 = vpop.f32.mrf.mxu0
    %v313 = vadd.f32 0.0, %v312
    %314 = vmatprep.mubr.bf16.mxu0 0
    %315 = vmatmul.mubr.bf16.gmra.mxu0 %v193
    %v316 = vpop.f32.mrf.mxu0
    %v317 = vadd.f32 0.0, %v316
    %v318 = vpop.f32.mrf.mxu0
    %v319 = vadd.f32 0.0, %v318
    %v320 = vpop.f32.mrf.mxu0
    %v321 = vadd.f32 0.0, %v320
    %v322 = vpop.f32.mrf.mxu0
    %v323 = vadd.f32 0.0, %v322
    %324 = vmatprep.mubr.bf16.mxu0 0
    %325 = vmatmul.mubr.bf16.gmra.mxu0 %v196
    %v326 = vpop.f32.mrf.mxu0
    %v327 = vadd.f32 0.0, %v326
    %v328 = vpop.f32.mrf.mxu0
    %v329 = vadd.f32 0.0, %v328
    %v330 = vpop.f32.mrf.mxu0
    %v331 = vadd.f32 0.0, %v330
    %v332 = vpop.f32.mrf.mxu0
    %v333 = vadd.f32 0.0, %v332
    %334 = vmatprep.mubr.bf16.mxu0 0
    %335 = vmatmul.mubr.bf16.gmra.mxu0 %v199
    %v336 = vpop.f32.mrf.mxu0
    %v337 = vadd.f32 0.0, %v336
    %v338 = vpop.f32.mrf.mxu0
    %v339 = vadd.f32 0.0, %v338
    %v340 = vpop.f32.mrf.mxu0
    %v341 = vadd.f32 0.0, %v340
    %v342 = vpop.f32.mrf.mxu0
    %v343 = vadd.f32 0.0, %v342
    %344 = vmatprep.mubr.bf16.mxu0 0
    %345 = vmatmul.mubr.bf16.gmra.mxu0 %v202
    %v346 = vpop.f32.mrf.mxu0
    %v347 = vadd.f32 0.0, %v346
    %v348 = vpop.f32.mrf.mxu0
    %v349 = vadd.f32 0.0, %v348
    %v350 = vpop.f32.mrf.mxu0
    %v351 = vadd.f32 0.0, %v350
    %v352 = vpop.f32.mrf.mxu0
    %v353 = vadd.f32 0.0, %v352
    %354 = vmatprep.mubr.bf16.mxu0 0
    %355 = vmatmul.mubr.bf16.gmra.mxu0 %v205
    %v356 = vpop.f32.mrf.mxu0
    %v357 = vadd.f32 0.0, %v356
    %v358 = vpop.f32.mrf.mxu0
    %v359 = vadd.f32 0.0, %v358
    %v360 = vpop.f32.mrf.mxu0
    %v361 = vadd.f32 0.0, %v360
    %v362 = vpop.f32.mrf.mxu0
    %v363 = vadd.f32 0.0, %v362
    %364 = vmatprep.mubr.bf16.mxu0 0
    %365 = vmatmul.mubr.bf16.gmra.mxu0 %v208
    %v366 = vpop.f32.mrf.mxu0
    %v367 = vadd.f32 0.0, %v366
    %v368 = vpop.f32.mrf.mxu0
    %v369 = vadd.f32 0.0, %v368
    %v370 = vpop.f32.mrf.mxu0
    %v371 = vadd.f32 0.0, %v370
    %v372 = vpop.f32.mrf.mxu0
    %v373 = vadd.f32 0.0, %v372
    %374 = vmatprep.mubr.bf16.mxu0 0
    %375 = vmatmul.mubr.bf16.gmra.mxu0 %v211
    %v376 = vpop.f32.mrf.mxu0
    %v377 = vadd.f32 0.0, %v376
    %v378 = vpop.f32.mrf.mxu0
    %v379 = vadd.f32 0.0, %v378
    %v380 = vpop.f32.mrf.mxu0
    %v381 = vadd.f32 0.0, %v380
    %v382 = vpop.f32.mrf.mxu0
    %v383 = vadd.f32 0.0, %v382
    %384 = vmatprep.mubr.bf16.mxu0 0
    %385 = vmatmul.mubr.bf16.gmra.mxu0 %v214
    %v386 = vpop.f32.mrf.mxu0
    %v387 = vadd.f32 0.0, %v386
    %v388 = vpop.f32.mrf.mxu0
    %v389 = vadd.f32 0.0, %v388
    %v390 = vpop.f32.mrf.mxu0
    %v391 = vadd.f32 0.0, %v390
    %v392 = vpop.f32.mrf.mxu0
    %v393 = vadd.f32 0.0, %v392
    %394 = vmatprep.mubr.bf16.mxu0 0
    %395 = vmatmul.mubr.bf16.gmra.mxu0 %v217
    %v396 = vpop.f32.mrf.mxu0
    %v397 = vadd.f32 0.0, %v396
    %v398 = vpop.f32.mrf.mxu0
    %v399 = vadd.f32 0.0, %v398
    %v400 = vpop.f32.mrf.mxu0
    %v401 = vadd.f32 0.0, %v400
    %v402 = vpop.f32.mrf.mxu0
    %v403 = vadd.f32 0.0, %v402
    %404 = vmatprep.mubr.bf16.mxu0 0
    %405 = vmatmul.mubr.bf16.gmra.mxu0 %v220
    %v406 = vpop.f32.mrf.mxu0
    %v407 = vadd.f32 0.0, %v406
    %v408 = vpop.f32.mrf.mxu0
    %v409 = vadd.f32 0.0, %v408
    %v410 = vpop.f32.mrf.mxu0
    %v411 = vadd.f32 0.0, %v410
    %v412 = vpop.f32.mrf.mxu0
    %v413 = vadd.f32 0.0, %v412
    %414 = vdwg.mxu0
    %v415 = vxor.u32 %v257, 2147483648
    %v416 = vxor.u32 %v259, 2147483648
    %v417 = vxor.u32 %v261, 2147483648
    %v418 = vxor.u32 %v263, 2147483648
    %v419 = vxor.u32 %v267, 2147483648
    %v420 = vxor.u32 %v269, 2147483648
    %v421 = vxor.u32 %v271, 2147483648
    %v422 = vxor.u32 %v273, 2147483648
    %v423 = vxor.u32 %v277, 2147483648
    %v424 = vxor.u32 %v279, 2147483648
    %v425 = vxor.u32 %v281, 2147483648
    %v426 = vxor.u32 %v283, 2147483648
    %v427 = vxor.u32 %v287, 2147483648
    %v428 = vxor.u32 %v289, 2147483648
    %v429 = vxor.u32 %v291, 2147483648
    %v430 = vxor.u32 %v293, 2147483648
    %v431 = vxor.u32 %v297, 2147483648
    %v432 = vxor.u32 %v299, 2147483648
    %v433 = vxor.u32 %v301, 2147483648
    %v434 = vxor.u32 %v303, 2147483648
    %v435 = vxor.u32 %v307, 2147483648
    %v436 = vxor.u32 %v309, 2147483648
    %v437 = vxor.u32 %v311, 2147483648
    %v438 = vxor.u32 %v313, 2147483648
    %v439 = vxor.u32 %v317, 2147483648
    %v440 = vxor.u32 %v319, 2147483648
    %v441 = vxor.u32 %v321, 2147483648
    %v442 = vxor.u32 %v323, 2147483648
    %v443 = vxor.u32 %v327, 2147483648
    %v444 = vxor.u32 %v329, 2147483648
    %v445 = vxor.u32 %v331, 2147483648
    %v446 = vxor.u32 %v333, 2147483648
    %v447 = vxor.u32 %v337, 2147483648
    %v448 = vxor.u32 %v339, 2147483648
    %v449 = vxor.u32 %v341, 2147483648
    %v450 = vxor.u32 %v343, 2147483648
    %v451 = vxor.u32 %v347, 2147483648
    %v452 = vxor.u32 %v349, 2147483648
    %v453 = vxor.u32 %v351, 2147483648
    %v454 = vxor.u32 %v353, 2147483648
    %v455 = vxor.u32 %v357, 2147483648
    %v456 = vxor.u32 %v359, 2147483648
    %v457 = vxor.u32 %v361, 2147483648
    %v458 = vxor.u32 %v363, 2147483648
    %v459 = vxor.u32 %v367, 2147483648
    %v460 = vxor.u32 %v369, 2147483648
    %v461 = vxor.u32 %v371, 2147483648
    %v462 = vxor.u32 %v373, 2147483648
    %v463 = vxor.u32 %v377, 2147483648
    %v464 = vxor.u32 %v379, 2147483648
    %v465 = vxor.u32 %v381, 2147483648
    %v466 = vxor.u32 %v383, 2147483648
    %v467 = vxor.u32 %v387, 2147483648
    %v468 = vxor.u32 %v389, 2147483648
    %v469 = vxor.u32 %v391, 2147483648
    %v470 = vxor.u32 %v393, 2147483648
    %v471 = vxor.u32 %v397, 2147483648
    %v472 = vxor.u32 %v399, 2147483648
    %v473 = vxor.u32 %v401, 2147483648
    %v474 = vxor.u32 %v403, 2147483648
    %v475 = vxor.u32 %v407, 2147483648
    %v476 = vxor.u32 %v409, 2147483648
    %v477 = vxor.u32 %v411, 2147483648
    %v478 = vxor.u32 %v413, 2147483648
    %v479 = vmul.f32 %v415, 1.442695
    %v480 = vpow.pop %v479
    %v481 = vmul.f32 %v416, 1.442695
    %v482 = vpow.pop %v481
    %v483 = vmul.f32 %v417, 1.442695
    %v484 = vpow.pop %v483
    %v485 = vmul.f32 %v418, 1.442695
    %v486 = vpow.pop %v485
    %v487 = vmul.f32 %v419, 1.442695
    %v488 = vpow.pop %v487
    %v489 = vmul.f32 %v420, 1.442695
    %v490 = vpow.pop %v489
    %v491 = vmul.f32 %v421, 1.442695
    %v492 = vpow.pop %v491
    %v493 = vmul.f32 %v422, 1.442695
    %v494 = vpow.pop %v493
    %v495 = vmul.f32 %v423, 1.442695
    %v496 = vpow.pop %v495
    %v497 = vmul.f32 %v424, 1.442695
    %v498 = vpow.pop %v497
    %v499 = vmul.f32 %v425, 1.442695
    %v500 = vpow.pop %v499
    %v501 = vmul.f32 %v426, 1.442695
    %v502 = vpow.pop %v501
    %v503 = vmul.f32 %v427, 1.442695
    %v504 = vpow.pop %v503
    %v505 = vmul.f32 %v428, 1.442695
    %v506 = vpow.pop %v505
    %v507 = vmul.f32 %v429, 1.442695
    %v508 = vpow.pop %v507
    %v509 = vmul.f32 %v430, 1.442695
    %v510 = vpow.pop %v509
    %v511 = vmul.f32 %v431, 1.442695
    %v512 = vpow.pop %v511
    %v513 = vmul.f32 %v432, 1.442695
    %v514 = vpow.pop %v513
    %v515 = vmul.f32 %v433, 1.442695
    %v516 = vpow.pop %v515
    %v517 = vmul.f32 %v434, 1.442695
    %v518 = vpow.pop %v517
    %v519 = vmul.f32 %v435, 1.442695
    %v520 = vpow.pop %v519
    %v521 = vmul.f32 %v436, 1.442695
    %v522 = vpow.pop %v521
    %v523 = vmul.f32 %v437, 1.442695
    %v524 = vpow.pop %v523
    %v525 = vmul.f32 %v438, 1.442695
    %v526 = vpow.pop %v525
    %v527 = vmul.f32 %v439, 1.442695
    %v528 = vpow.pop %v527
    %v529 = vmul.f32 %v440, 1.442695
    %v530 = vpow.pop %v529
    %v531 = vmul.f32 %v441, 1.442695
    %v532 = vpow.pop %v531
    %v533 = vmul.f32 %v442, 1.442695
    %v534 = vpow.pop %v533
    %v535 = vmul.f32 %v443, 1.442695
    %v536 = vpow.pop %v535
    %v537 = vmul.f32 %v444, 1.442695
    %v538 = vpow.pop %v537
    %v539 = vmul.f32 %v445, 1.442695
    %v540 = vpow.pop %v539
    %v541 = vmul.f32 %v446, 1.442695
    %v542 = vpow.pop %v541
    %v543 = vmul.f32 %v447, 1.442695
    %v544 = vpow.pop %v543
    %v545 = vmul.f32 %v448, 1.442695
    %v546 = vpow.pop %v545
    %v547 = vmul.f32 %v449, 1.442695
    %v548 = vpow.pop %v547
    %v549 = vmul.f32 %v450, 1.442695
    %v550 = vpow.pop %v549
    %v551 = vmul.f32 %v451, 1.442695
    %v552 = vpow.pop %v551
    %v553 = vmul.f32 %v452, 1.442695
    %v554 = vpow.pop %v553
    %v555 = vmul.f32 %v453, 1.442695
    %v556 = vpow.pop %v555
    %v557 = vmul.f32 %v454, 1.442695
    %v558 = vpow.pop %v557
    %v559 = vmul.f32 %v455, 1.442695
    %v560 = vpow.pop %v559
    %v561 = vmul.f32 %v456, 1.442695
    %v562 = vpow.pop %v561
    %v563 = vmul.f32 %v457, 1.442695
    %v564 = vpow.pop %v563
    %v565 = vmul.f32 %v458, 1.442695
    %v566 = vpow.pop %v565
    %v567 = vmul.f32 %v459, 1.442695
    %v568 = vpow.pop %v567
    %v569 = vmul.f32 %v460, 1.442695
    %v570 = vpow.pop %v569
    %v571 = vmul.f32 %v461, 1.442695
    %v572 = vpow.pop %v571
    %v573 = vmul.f32 %v462, 1.442695
    %v574 = vpow.pop %v573
    %v575 = vmul.f32 %v463, 1.442695
    %v576 = vpow.pop %v575
    %v577 = vmul.f32 %v464, 1.442695
    %v578 = vpow.pop %v577
    %v579 = vmul.f32 %v465, 1.442695
    %v580 = vpow.pop %v579
    %v581 = vmul.f32 %v466, 1.442695
    %v582 = vpow.pop %v581
    %v583 = vmul.f32 %v467, 1.442695
    %v584 = vpow.pop %v583
    %v585 = vmul.f32 %v468, 1.442695
    %v586 = vpow.pop %v585
    %v587 = vmul.f32 %v469, 1.442695
    %v588 = vpow.pop %v587
    %v589 = vmul.f32 %v470, 1.442695
    %v590 = vpow.pop %v589
    %v591 = vmul.f32 %v471, 1.442695
    %v592 = vpow.pop %v591
    %v593 = vmul.f32 %v472, 1.442695
    %v594 = vpow.pop %v593
    %v595 = vmul.f32 %v473, 1.442695
    %v596 = vpow.pop %v595
    %v597 = vmul.f32 %v474, 1.442695
    %v598 = vpow.pop %v597
    %v599 = vmul.f32 %v475, 1.442695
    %v600 = vpow.pop %v599
    %v601 = vmul.f32 %v476, 1.442695
    %v602 = vpow.pop %v601
    %v603 = vmul.f32 %v477, 1.442695
    %v604 = vpow.pop %v603
    %v605 = vmul.f32 %v478, 1.442695
    %v606 = vpow.pop %v605
    %v607 = vadd.f32 %v480, 1.0
    %v608 = vadd.f32 %v482, 1.0
    %v609 = vadd.f32 %v484, 1.0
    %v610 = vadd.f32 %v486, 1.0
    %v611 = vadd.f32 %v488, 1.0
    %v612 = vadd.f32 %v490, 1.0
    %v613 = vadd.f32 %v492, 1.0
    %v614 = vadd.f32 %v494, 1.0
    %v615 = vadd.f32 %v496, 1.0
    %v616 = vadd.f32 %v498, 1.0
    %v617 = vadd.f32 %v500, 1.0
    %v618 = vadd.f32 %v502, 1.0
    %v619 = vadd.f32 %v504, 1.0
    %v620 = vadd.f32 %v506, 1.0
    %v621 = vadd.f32 %v508, 1.0
    %v622 = vadd.f32 %v510, 1.0
    %v623 = vadd.f32 %v512, 1.0
    %v624 = vadd.f32 %v514, 1.0
    %v625 = vadd.f32 %v516, 1.0
    %v626 = vadd.f32 %v518, 1.0
    %v627 = vadd.f32 %v520, 1.0
    %v628 = vadd.f32 %v522, 1.0
    %v629 = vadd.f32 %v524, 1.0
    %v630 = vadd.f32 %v526, 1.0
    %v631 = vadd.f32 %v528, 1.0
    %v632 = vadd.f32 %v530, 1.0
    %v633 = vadd.f32 %v532, 1.0
    %v634 = vadd.f32 %v534, 1.0
    %v635 = vadd.f32 %v536, 1.0
    %v636 = vadd.f32 %v538, 1.0
    %v637 = vadd.f32 %v540, 1.0
    %v638 = vadd.f32 %v542, 1.0
    %v639 = vadd.f32 %v544, 1.0
    %v640 = vadd.f32 %v546, 1.0
    %v641 = vadd.f32 %v548, 1.0
    %v642 = vadd.f32 %v550, 1.0
    %v643 = vadd.f32 %v552, 1.0
    %v644 = vadd.f32 %v554, 1.0
    %v645 = vadd.f32 %v556, 1.0
    %v646 = vadd.f32 %v558, 1.0
    %v647 = vadd.f32 %v560, 1.0
    %v648 = vadd.f32 %v562, 1.0
    %v649 = vadd.f32 %v564, 1.0
    %v650 = vadd.f32 %v566, 1.0
    %v651 = vadd.f32 %v568, 1.0
    %v652 = vadd.f32 %v570, 1.0
    %v653 = vadd.f32 %v572, 1.0
    %v654 = vadd.f32 %v574, 1.0
    %v655 = vadd.f32 %v576, 1.0
    %v656 = vadd.f32 %v578, 1.0
    %v657 = vadd.f32 %v580, 1.0
    %v658 = vadd.f32 %v582, 1.0
    %v659 = vadd.f32 %v584, 1.0
    %v660 = vadd.f32 %v586, 1.0
    %v661 = vadd.f32 %v588, 1.0
    %v662 = vadd.f32 %v590, 1.0
    %v663 = vadd.f32 %v592, 1.0
    %v664 = vadd.f32 %v594, 1.0
    %v665 = vadd.f32 %v596, 1.0
    %v666 = vadd.f32 %v598, 1.0
    %v667 = vadd.f32 %v600, 1.0
    %v668 = vadd.f32 %v602, 1.0
    %v669 = vadd.f32 %v604, 1.0
    %v670 = vadd.f32 %v606, 1.0
    %v671 = vrcp.pop %v607
    %v672 = vmul.f32 1.0, %v671
    %v673 = vrcp.pop %v608
    %v674 = vmul.f32 1.0, %v673
    %v675 = vrcp.pop %v609
    %v676 = vmul.f32 1.0, %v675
    %v677 = vrcp.pop %v610
    %v678 = vmul.f32 1.0, %v677
    %v679 = vrcp.pop %v611
    %v680 = vmul.f32 1.0, %v679
    %v681 = vrcp.pop %v612
    %v682 = vmul.f32 1.0, %v681
    %v683 = vrcp.pop %v613
    %v684 = vmul.f32 1.0, %v683
    %v685 = vrcp.pop %v614
    %v686 = vmul.f32 1.0, %v685
    %v687 = vrcp.pop %v615
    %v688 = vmul.f32 1.0, %v687
    %v689 = vrcp.pop %v616
    %v690 = vmul.f32 1.0, %v689
    %v691 = vrcp.pop %v617
    %v692 = vmul.f32 1.0, %v691
    %v693 = vrcp.pop %v618
    %v694 = vmul.f32 1.0, %v693
    %v695 = vrcp.pop %v619
    %v696 = vmul.f32 1.0, %v695
    %v697 = vrcp.pop %v620
    %v698 = vmul.f32 1.0, %v697
    %v699 = vrcp.pop %v621
    %v700 = vmul.f32 1.0, %v699
    %v701 = vrcp.pop %v622
    %v702 = vmul.f32 1.0, %v701
    %v703 = vrcp.pop %v623
    %v704 = vmul.f32 1.0, %v703
    %v705 = vrcp.pop %v624
    %v706 = vmul.f32 1.0, %v705
    %v707 = vrcp.pop %v625
    %v708 = vmul.f32 1.0, %v707
    %v709 = vrcp.pop %v626
    %v710 = vmul.f32 1.0, %v709
    %v711 = vrcp.pop %v627
    %v712 = vmul.f32 1.0, %v711
    %v713 = vrcp.pop %v628
    %v714 = vmul.f32 1.0, %v713
    %v715 = vrcp.pop %v629
    %v716 = vmul.f32 1.0, %v715
    %v717 = vrcp.pop %v630
    %v718 = vmul.f32 1.0, %v717
    %v719 = vrcp.pop %v631
    %v720 = vmul.f32 1.0, %v719
    %v721 = vrcp.pop %v632
    %v722 = vmul.f32 1.0, %v721
    %v723 = vrcp.pop %v633
    %v724 = vmul.f32 1.0, %v723
    %v725 = vrcp.pop %v634
    %v726 = vmul.f32 1.0, %v725
    %v727 = vrcp.pop %v635
    %v728 = vmul.f32 1.0, %v727
    %v729 = vrcp.pop %v636
    %v730 = vmul.f32 1.0, %v729
    %v731 = vrcp.pop %v637
    %v732 = vmul.f32 1.0, %v731
    %v733 = vrcp.pop %v638
    %v734 = vmul.f32 1.0, %v733
    %v735 = vrcp.pop %v639
    %v736 = vmul.f32 1.0, %v735
    %v737 = vrcp.pop %v640
    %v738 = vmul.f32 1.0, %v737
    %v739 = vrcp.pop %v641
    %v740 = vmul.f32 1.0, %v739
    %v741 = vrcp.pop %v642
    %v742 = vmul.f32 1.0, %v741
    %v743 = vrcp.pop %v643
    %v744 = vmul.f32 1.0, %v743
    %v745 = vrcp.pop %v644
    %v746 = vmul.f32 1.0, %v745
    %v747 = vrcp.pop %v645
    %v748 = vmul.f32 1.0, %v747
    %v749 = vrcp.pop %v646
    %v750 = vmul.f32 1.0, %v749
    %v751 = vrcp.pop %v647
    %v752 = vmul.f32 1.0, %v751
    %v753 = vrcp.pop %v648
    %v754 = vmul.f32 1.0, %v753
    %v755 = vrcp.pop %v649
    %v756 = vmul.f32 1.0, %v755
    %v757 = vrcp.pop %v650
    %v758 = vmul.f32 1.0, %v757
    %v759 = vrcp.pop %v651
    %v760 = vmul.f32 1.0, %v759
    %v761 = vrcp.pop %v652
    %v762 = vmul.f32 1.0, %v761
    %v763 = vrcp.pop %v653
    %v764 = vmul.f32 1.0, %v763
    %v765 = vrcp.pop %v654
    %v766 = vmul.f32 1.0, %v765
    %v767 = vrcp.pop %v655
    %v768 = vmul.f32 1.0, %v767
    %v769 = vrcp.pop %v656
    %v770 = vmul.f32 1.0, %v769
    %v771 = vrcp.pop %v657
    %v772 = vmul.f32 1.0, %v771
    %v773 = vrcp.pop %v658
    %v774 = vmul.f32 1.0, %v773
    %v775 = vrcp.pop %v659
    %v776 = vmul.f32 1.0, %v775
    %v777 = vrcp.pop %v660
    %v778 = vmul.f32 1.0, %v777
    %v779 = vrcp.pop %v661
    %v780 = vmul.f32 1.0, %v779
    %v781 = vrcp.pop %v662
    %v782 = vmul.f32 1.0, %v781
    %v783 = vrcp.pop %v663
    %v784 = vmul.f32 1.0, %v783
    %v785 = vrcp.pop %v664
    %v786 = vmul.f32 1.0, %v785
    %v787 = vrcp.pop %v665
    %v788 = vmul.f32 1.0, %v787
    %v789 = vrcp.pop %v666
    %v790 = vmul.f32 1.0, %v789
    %v791 = vrcp.pop %v667
    %v792 = vmul.f32 1.0, %v791
    %v793 = vrcp.pop %v668
    %v794 = vmul.f32 1.0, %v793
    %v795 = vrcp.pop %v669
    %v796 = vmul.f32 1.0, %v795
    %v797 = vrcp.pop %v670
    %v798 = vmul.f32 1.0, %v797
    %799 = vst [vmem:[#allocation2] sm:$0xff] %v672
    %800 = vst [vmem:[#allocation2 + $0x8] sm:$0xff] %v674
    %801 = vst [vmem:[#allocation2 + $0x10] sm:$0xff] %v676
    %802 = vst [vmem:[#allocation2 + $0x18] sm:$0xff] %v678
    %803 = vst [vmem:[#allocation2 + $0x20] sm:$0xff] %v680
    %804 = vst [vmem:[#allocation2 + $0x28] sm:$0xff] %v682
    %805 = vst [vmem:[#allocation2 + $0x30] sm:$0xff] %v684
    %806 = vst [vmem:[#allocation2 + $0x38] sm:$0xff] %v686
    %807 = vst [vmem:[#allocation2 + $0x40] sm:$0xff] %v688
    %808 = vst [vmem:[#allocation2 + $0x48] sm:$0xff] %v690
    %809 = vst [vmem:[#allocation2 + $0x50] sm:$0xff] %v692
    %810 = vst [vmem:[#allocation2 + $0x58] sm:$0xff] %v694
    %811 = vst [vmem:[#allocation2 + $0x60] sm:$0xff] %v696
    %812 = vst [vmem:[#allocation2 + $0x68] sm:$0xff] %v698
    %813 = vst [vmem:[#allocation2 + $0x70] sm:$0xff] %v700
    %814 = vst [vmem:[#allocation2 + $0x78] sm:$0xff] %v702
    %815 = vst [vmem:[#allocation2 + $0x80] sm:$0xff] %v704
    %816 = vst [vmem:[#allocation2 + $0x88] sm:$0xff] %v706
    %817 = vst [vmem:[#allocation2 + $0x90] sm:$0xff] %v708
    %818 = vst [vmem:[#allocation2 + $0x98] sm:$0xff] %v710
    %819 = vst [vmem:[#allocation2 + $0xa0] sm:$0xff] %v712
    %820 = vst [vmem:[#allocation2 + $0xa8] sm:$0xff] %v714
    %821 = vst [vmem:[#allocation2 + $0xb0] sm:$0xff] %v716
    %822 = vst [vmem:[#allocation2 + $0xb8] sm:$0xff] %v718
    %823 = vst [vmem:[#allocation2 + $0xc0] sm:$0xff] %v720
    %824 = vst [vmem:[#allocation2 + $0xc8] sm:$0xff] %v722
    %825 = vst [vmem:[#allocation2 + $0xd0] sm:$0xff] %v724
    %826 = vst [vmem:[#allocation2 + $0xd8] sm:$0xff] %v726
    %827 = vst [vmem:[#allocation2 + $0xe0] sm:$0xff] %v728
    %828 = vst [vmem:[#allocation2 + $0xe8] sm:$0xff] %v730
    %829 = vst [vmem:[#allocation2 + $0xf0] sm:$0xff] %v732
    %830 = vst [vmem:[#allocation2 + $0xf8] sm:$0xff] %v734
    %831 = vst [vmem:[#allocation2 + $0x100] sm:$0xff] %v736
    %832 = vst [vmem:[#allocation2 + $0x108] sm:$0xff] %v738
    %833 = vst [vmem:[#allocation2 + $0x110] sm:$0xff] %v740
    %834 = vst [vmem:[#allocation2 + $0x118] sm:$0xff] %v742
    %835 = vst [vmem:[#allocation2 + $0x120] sm:$0xff] %v744
    %836 = vst [vmem:[#allocation2 + $0x128] sm:$0xff] %v746
    %837 = vst [vmem:[#allocation2 + $0x130] sm:$0xff] %v748
    %838 = vst [vmem:[#allocation2 + $0x138] sm:$0xff] %v750
    %839 = vst [vmem:[#allocation2 + $0x140] sm:$0xff] %v752
    %840 = vst [vmem:[#allocation2 + $0x148] sm:$0xff] %v754
    %841 = vst [vmem:[#allocation2 + $0x150] sm:$0xff] %v756
    %842 = vst [vmem:[#allocation2 + $0x158] sm:$0xff] %v758
    %843 = vst [vmem:[#allocation2 + $0x160] sm:$0xff] %v760
    %844 = vst [vmem:[#allocation2 + $0x168] sm:$0xff] %v762
    %845 = vst [vmem:[#allocation2 + $0x170] sm:$0xff] %v764
    %846 = vst [vmem:[#allocation2 + $0x178] sm:$0xff] %v766
    %847 = vst [vmem:[#allocation2 + $0x180] sm:$0xff] %v768
    %848 = vst [vmem:[#allocation2 + $0x188] sm:$0xff] %v770
    %849 = vst [vmem:[#allocation2 + $0x190] sm:$0xff] %v772
    %850 = vst [vmem:[#allocation2 + $0x198] sm:$0xff] %v774
    %851 = vst [vmem:[#allocation2 + $0x1a0] sm:$0xff] %v776
    %852 = vst [vmem:[#allocation2 + $0x1a8] sm:$0xff] %v778
    %853 = vst [vmem:[#allocation2 + $0x1b0] sm:$0xff] %v780
    %854 = vst [vmem:[#allocation2 + $0x1b8] sm:$0xff] %v782
    %855 = vst [vmem:[#allocation2 + $0x1c0] sm:$0xff] %v784
    %856 = vst [vmem:[#allocation2 + $0x1c8] sm:$0xff] %v786
    %857 = vst [vmem:[#allocation2 + $0x1d0] sm:$0xff] %v788
    %858 = vst [vmem:[#allocation2 + $0x1d8] sm:$0xff] %v790
    %859 = vst [vmem:[#allocation2 + $0x1e0] sm:$0xff] %v792
    %860 = vst [vmem:[#allocation2 + $0x1e8] sm:$0xff] %v794
    %861 = vst [vmem:[#allocation2 + $0x1f0] sm:$0xff] %v796
    %862 = vst [vmem:[#allocation2 + $0x1f8] sm:$0xff] %v798
    // Predicated region
    $region10: #{tpu_custom_call.1} parent=1 // pred_check
      _
    $region11: #{tpu_custom_call.1} parent=1 // pred_check_branch
      %864 = sbr.rel (0) target = $region13
    $region12: #{tpu_custom_call.1} parent=1 // pred_region
      %s866 = ssub.s32 8192, 8192
      %867 = vsyncadd [#allocation3], %s866
      %s868 = sshll.u32 [#allocation2], 4
      %s869 = int_to_ptr.vmem [resolvable:$true] %s868
      %874 = dma.vmem_to_hbm [thread:$0]  %s869, 8192, %s2, [#allocation3], 256, 256, 16
    $region13: #{tpu_custom_call.1} parent=1 // pred_fallthru
      _
    // Predicated region
    $region14: #{tpu_custom_call.1} parent=1 // pred_check
      _
    $region15: #{tpu_custom_call.1} parent=1 // pred_check_branch
      %876 = sbr.rel (0) target = $region17
    $region16: #{tpu_custom_call.1} parent=1 // pred_region
      %877 = dma.done [#allocation3], 8192
    $region17: #{tpu_custom_call.1} parent=1 // pred_fallthru
      _
    %878 = vsyncpa [#allocation3], 1

</llo_original>
